<compile_context>
chip_gen: v6e
topology: v6e:2x2x1
jax: 0.10.0
libtpu: 0.0.40
codegen_flags: <defaults>
</compile_context>

<pallas_src>
import functools
import math

import jax
import jax.numpy as jnp
from jax.experimental import pallas as pl
from jax.experimental.pallas import tpu as pltpu

OUT_FEATURES = 3      # nn.Linear(in_feature, 3)
OUT_PADDED = 128      # weight columns padded to one full lane tile for the MXU

# Per-buffer budget for the streamed activation tile (the BlockSpec pipeline
# double-buffers it); keyed by TPU generation.
_X_TILE_BYTES = {"v5e": 5 << 20, "v6e": 10 << 20, "v7x": 10 << 20, "unknown": 4 << 20}
# Caps for the explicit scoped-VMEM limit (headroom under physical VMEM:
# 128 MiB on v5e/v6e, 64 MiB per TensorCore on v7x).
_VMEM_CAP_BYTES = {"v5e": 100 << 20, "v6e": 100 << 20, "v7x": 56 << 20, "unknown": 56 << 20}


def _tpu_generation():
    try:
        kind = jax.devices()[0].device_kind.lower()
    except Exception:
        return "unknown"
    if "v5" in kind:
        return "v5e"
    if "v6" in kind:
        return "v6e"
    if "v7" in kind or "7x" in kind:
        return "v7x"
    return "unknown"


def _gelu_erf(x):
    # Matches ActivateFun._gelu: x * 0.5 * (1 + erf(x / sqrt(2)))
    return x * 0.5 * (1.0 + jax.lax.erf(x / math.sqrt(2.0)))


def _choose_batch_tile(batch, in_feature, itemsize, gen):
    if batch <= 8:
        return batch                          # full-dim block: no (8, ·) padding needed
    budget = _X_TILE_BYTES[gen]
    rows = budget // max(1, in_feature * itemsize)
    rows = max(8, min(batch, int(rows)))
    if rows < batch:
        rows = max(8, (rows // 8) * 8)        # second-to-last block dim must be 8-aligned
    # Guarantee >= 2 grid steps so the "parallel" axis can feed both v7x TensorCores.
    if batch >= 16 and pl.cdiv(batch, rows) < 2:
        rows = max(8, (pl.cdiv(batch, 2) // 8) * 8)
    return rows


def bert_classify_kernel(x_ref, w_ref, b_ref, o_ref):
    # x_ref: [TB, F]; w_ref: [F, OUT_PADDED]; b_ref: [1, OUT_PADDED] f32;
    # o_ref: [TB, OUT_FEATURES]
    x = x_ref[...]
    w = w_ref[...]
    if x.dtype != w.dtype:                    # e.g. f32 activations with bf16 params
        x = x.astype(w.dtype)
    y = jnp.dot(x, w, preferred_element_type=jnp.float32)   # MXU, f32 accumulate
    y = y + b_ref[...]                                       # f32 bias
    # Only the first OUT_FEATURES lanes are live; write the narrow output directly.
    o_ref[...] = _gelu_erf(y[:, :OUT_FEATURES]).astype(o_ref.dtype)


def prepare_bert_classify_params(weight, bias, param_dtype=jnp.float32):
    """One-time re-layout of nn.Linear params: [out, in] -> [in, OUT_PADDED].

    Call once at parameter-load time and reuse the result for every forward.
    On v7x, use param_dtype=jnp.bfloat16 (ideally with bf16 activations) to keep
    f32-emulation MXU passes off the critical path."""
    out_f, in_f = weight.shape
    assert out_f == OUT_FEATURES, weight.shape
    w_t = jnp.zeros((in_f, OUT_PADDED), dtype=param_dtype)
    w_t = w_t.at[:, :OUT_FEATURES].set(weight.T.astype(param_dtype))
    b_p = jnp.zeros((1, OUT_PADDED), dtype=jnp.float32)
    b_p = b_p.at[0, :OUT_FEATURES].set(bias.astype(jnp.float32))
    return w_t, b_p


def _param_spec(shape, single_buffered):
    if single_buffered:
        # Constant index_map: never re-fetched, so one buffer is enough.
        return pl.BlockSpec(shape, lambda i: (0, 0), pipeline_mode=pl.Buffered(1))
    return pl.BlockSpec(shape, lambda i: (0, 0))


@functools.lru_cache(maxsize=None)
def _build_apply(batch, in_feature, x_dtype, w_dtype, out_dtype, single_buffer_params):
    gen = _tpu_generation()
    x_item = jnp.dtype(x_dtype).itemsize
    w_item = jnp.dtype(w_dtype).itemsize
    o_item = jnp.dtype(out_dtype).itemsize

    tb = _choose_batch_tile(batch, in_feature, x_item, gen)
    grid = (pl.cdiv(batch, tb),)

    # Explicit scoped-VMEM limit: 2 x-tile buffers + weight/bias buffers
    # (1 copy if single-buffered, else 2) + 2 output buffers + headroom.
    x_tile_bytes = tb * in_feature * x_item
    w_bytes = in_feature * OUT_PADDED * w_item
    b_bytes = OUT_PADDED * 4
    o_tile_bytes = tb * OUT_FEATURES * o_item
    n_param_bufs = 1 if single_buffer_params else 2
    vmem_need = 2 * x_tile_bytes + n_param_bufs * (w_bytes + b_bytes) + 2 * o_tile_bytes
    vmem_limit = int(min(_VMEM_CAP_BYTES[gen], max(vmem_need + (2 << 20), 16 << 20)))

    cost = pl.CostEstimate(
        flops=2 * batch * in_feature * OUT_PADDED,
        transcendentals=batch * OUT_FEATURES,
        bytes_accessed=(batch * in_feature * x_item + w_bytes + b_bytes
                        + batch * OUT_FEATURES * o_item),
    )

    call = pl.pallas_call(
        bert_classify_kernel,
        out_shape=jax.ShapeDtypeStruct((batch, OUT_FEATURES), out_dtype),
        grid=grid,
        in_specs=[
            pl.BlockSpec((tb, in_feature), lambda i: (i, 0)),              # streamed x
            _param_spec((in_feature, OUT_PADDED), single_buffer_params),   # resident W
            _param_spec((1, OUT_PADDED), single_buffer_params),            # resident b
        ],
        out_specs=pl.BlockSpec((tb, OUT_FEATURES), lambda i: (i, 0)),
        compiler_params=pltpu.CompilerParams(
            dimension_semantics=("parallel",),   # megacore sharding on v7x
            vmem_limit_bytes=vmem_limit,
        ),
        cost_estimate=cost,
    )
    return jax.jit(call)


_PARAM_SINGLE_BUFFER_OK = None   # one-time probe result for pipeline_mode=pl.Buffered(1)


def bert_classify_apply(x, w_padded, b_padded, out_dtype=jnp.float32):
    """x: [batch, in_feature]; w_padded/b_padded from prepare_bert_classify_params."""
    global _PARAM_SINGLE_BUFFER_OK
    batch, in_feature = x.shape
    key = (batch, in_feature, jnp.dtype(x.dtype), jnp.dtype(w_padded.dtype),
           jnp.dtype(out_dtype))
    if _PARAM_SINGLE_BUFFER_OK is not False:
        try:
            out = _build_apply(*key, True)(x, w_padded, b_padded)
            _PARAM_SINGLE_BUFFER_OK = True
            return out
        except Exception:
            if _PARAM_SINGLE_BUFFER_OK:      # worked before -> genuine error, re-raise
                raise
            _PARAM_SINGLE_BUFFER_OK = False  # unsupported on this build: fall back
    return _build_apply(*key, False)(x, w_padded, b_padded)


def bert_classify_forward(x, weight, bias):
    """Convenience wrapper (re-lays out params every call). For repeated calls,
    cache prepare_bert_classify_params() output and use bert_classify_apply."""
    w_p, b_p = prepare_bert_classify_params(weight, bias, param_dtype=x.dtype)
    return bert_classify_apply(x, w_p, b_p)


def reference_forward(x, weight, bias):
    return _gelu_erf(x @ weight.T + bias)


if __name__ == "__main__":
    key = jax.random.PRNGKey(0)
    kx, kw, kb, kx2 = jax.random.split(key, 4)

    in_feature = 32
    bound = 1.0 / math.sqrt(in_feature)
    weight = jax.random.uniform(kw, (OUT_FEATURES, in_feature),
                                minval=-bound, maxval=bound, dtype=jnp.float32)
    bias = jax.random.uniform(kb, (OUT_FEATURES,),
                              minval=-bound, maxval=bound, dtype=jnp.float32)

    # Hoisted parameter re-layout (done once), then the Pallas forward.
    w_p, b_p = prepare_bert_classify_params(weight, bias)

    # --- small f32 check (batch=8, single tile) ------------------------------
    x = jax.random.normal(kx, (8, in_feature), dtype=jnp.float32)
    out = jax.block_until_ready(bert_classify_apply(x, w_p, b_p))
    ref = reference_forward(x, weight, bias)
    assert out.shape == (8, OUT_FEATURES), out.shape
    assert jnp.allclose(out, ref, atol=1e-5, rtol=1e-5), \
        f"f32 max abs err {jnp.max(jnp.abs(out - ref))}"

    # --- multi-tile f32 check (batch=64 -> >=2 grid steps / megacore path) ---
    x2 = jax.random.normal(kx2, (64, in_feature), dtype=jnp.float32)
    out2 = jax.block_until_ready(bert_classify_apply(x2, w_p, b_p))
    ref2 = reference_forward(x2, weight, bias)
    assert jnp.allclose(out2, ref2, atol=1e-5, rtol=1e-5), \
        f"multi-tile max abs err {jnp.max(jnp.abs(out2 - ref2))}"

    # --- bf16-dot path (the v7x-recommended configuration), loose tolerance ---
    w_p16, b_p16 = prepare_bert_classify_params(weight, bias, param_dtype=jnp.bfloat16)
    out16 = jax.block_until_ready(bert_classify_apply(x, w_p16, b_p16))
    assert jnp.allclose(out16, ref, atol=3e-2, rtol=3e-2), \
        f"bf16 max abs err {jnp.max(jnp.abs(out16 - ref))}"

    print("KERNEL_OK")
</pallas_src>

<mosaic_0001>
module attributes {stable_mosaic.version = 11 : i64} {
  func.func @bert_classify_kernel(%arg0: i32, %arg1: memref<8x32xf32, #tpu.memory_space<vmem>>, %arg2: memref<32x128xf32, #tpu.memory_space<vmem>>, %arg3: memref<1x128xf32, #tpu.memory_space<vmem>>, %arg4: memref<8x3xf32, #tpu.memory_space<vmem>>) attributes {dimension_semantics = [#tpu.dimension_semantics<parallel>], iteration_bounds = array<i64: 1>, scalar_prefetch = 0 : i64, scratch_operands = 0 : i64, tpu.core_type = #tpu.core_type<tc>, window_params = [{transform_indices = @transform_0, window_bounds = array<i64: 8, 32>}, {pipeline_mode = #tpu.pipeline_mode<synchronous>, transform_indices = @transform_1, window_bounds = array<i64: 32, 128>}, {pipeline_mode = #tpu.pipeline_mode<synchronous>, transform_indices = @transform_2, window_bounds = array<i64: 1, 128>}, {transform_indices = @transform_3, window_bounds = array<i64: 8, 3>}]} {
    %c0 = arith.constant 0 : index
    %c0_0 = arith.constant 0 : index
    %0 = vector.load %arg1[%c0, %c0_0] : memref<8x32xf32, #tpu.memory_space<vmem>>, vector<8x32xf32>
    %c0_1 = arith.constant 0 : index
    %c0_2 = arith.constant 0 : index
    %1 = vector.load %arg2[%c0_1, %c0_2] : memref<32x128xf32, #tpu.memory_space<vmem>>, vector<32x128xf32>
    %cst = arith.constant dense<0.000000e+00> : vector<8x128xf32>
    %2 = tpu.matmul %0, %1, %cst {dimension_numbers = #tpu.dot_dimension_numbers<[1], [0], [0], [1], [0, 0, 1, 1], [], []>} : vector<8x32xf32>, vector<32x128xf32>, vector<8x128xf32> -> vector<8x128xf32>
    %c0_3 = arith.constant 0 : index
    %c0_4 = arith.constant 0 : index
    %3 = vector.load %arg3[%c0_3, %c0_4] : memref<1x128xf32, #tpu.memory_space<vmem>>, vector<1x128xf32>
    %4 = vector.broadcast %3 : vector<1x128xf32> to vector<8x128xf32>
    %5 = arith.addf %2, %4 : vector<8x128xf32>
    %6 = vector.extract_strided_slice %5 {offsets = [0, 0], sizes = [8, 3], strides = [1, 1]} : vector<8x128xf32> to vector<8x3xf32>
    %cst_5 = arith.constant 5.000000e-01 : f32
    %7 = vector.broadcast %cst_5 : f32 to vector<8x3xf32>
    %8 = arith.mulf %6, %7 : vector<8x3xf32>
    %cst_6 = arith.constant 1.41421354 : f32
    %9 = vector.broadcast %cst_6 : f32 to vector<8x3xf32>
    %10 = arith.divf %6, %9 : vector<8x3xf32>
    %11 = math.erf %10 : vector<8x3xf32>
    %cst_7 = arith.constant 1.000000e+00 : f32
    %12 = vector.broadcast %cst_7 : f32 to vector<8x3xf32>
    %13 = arith.addf %12, %11 : vector<8x3xf32>
    %14 = arith.mulf %8, %13 : vector<8x3xf32>
    %c0_8 = arith.constant 0 : index
    %c0_9 = arith.constant 0 : index
    %15 = vector.load %arg4[%c0_8, %c0_9] : memref<8x3xf32, #tpu.memory_space<vmem>>, vector<8x3xf32>
    tpu.vector_store %arg4[%c0_8, %c0_9], %14 {strides = array<i32>} : memref<8x3xf32, #tpu.memory_space<vmem>>, vector<8x3xf32>,
    return
  }
  func.func @transform_0(%arg0: i32) -> (i32, i32) {
    %c0_i32 = arith.constant 0 : i32
    %c0_i32_0 = arith.constant 0 : i32
    return %arg0, %c0_i32 : i32, i32
  }
  func.func @transform_1(%arg0: i32) -> (i32, i32) {
    %c0_i32 = arith.constant 0 : i32
    %c0_i32_0 = arith.constant 0 : i32
    %c0_i32_1 = arith.constant 0 : i32
    return %c0_i32, %c0_i32_0 : i32, i32
  }
  func.func @transform_2(%arg0: i32) -> (i32, i32) {
    %c0_i32 = arith.constant 0 : i32
    %c0_i32_0 = arith.constant 0 : i32
    %c0_i32_1 = arith.constant 0 : i32
    return %c0_i32, %c0_i32_0 : i32, i32
  }
  func.func @transform_3(%arg0: i32) -> (i32, i32) {
    %c0_i32 = arith.constant 0 : i32
    %c0_i32_0 = arith.constant 0 : i32
    return %arg0, %c0_i32 : i32, i32
  }
}

module attributes {stable_mosaic.version = 11 : i64} {
  func.func @bert_classify_kernel(%arg0: i32, %arg1: memref<8x32xf32, #tpu.memory_space<vmem>>, %arg2: memref<32x128xf32, #tpu.memory_space<vmem>>, %arg3: memref<1x128xf32, #tpu.memory_space<vmem>>, %arg4: memref<8x3xf32, #tpu.memory_space<vmem>>) attributes {dimension_semantics = [#tpu.dimension_semantics<parallel>], iteration_bounds = array<i64: 1>, scalar_prefetch = 0 : i64, scratch_operands = 0 : i64, tpu.core_type = #tpu.core_type<tc>, window_params = [{transform_indices = @transform_0, window_bounds = array<i64: 8, 32>}, {pipeline_mode = #tpu.pipeline_mode<synchronous>, transform_indices = @transform_1, window_bounds = array<i64: 32, 128>}, {pipeline_mode = #tpu.pipeline_mode<synchronous>, transform_indices = @transform_2, window_bounds = array<i64: 1, 128>}, {transform_indices = @transform_3, window_bounds = array<i64: 8, 3>}]} {
    %c0 = arith.constant 0 : index
    %c0_0 = arith.constant 0 : index
    %0 = vector.load %arg1[%c0, %c0_0] : memref<8x32xf32, #tpu.memory_space<vmem>>, vector<8x32xf32>
    %c0_1 = arith.constant 0 : index
    %c0_2 = arith.constant 0 : index
    %1 = vector.load %arg2[%c0_1, %c0_2] : memref<32x128xf32, #tpu.memory_space<vmem>>, vector<32x128xf32>
    %cst = arith.constant dense<0.000000e+00> : vector<8x128xf32>
    %2 = tpu.matmul %0, %1, %cst {dimension_numbers = #tpu.dot_dimension_numbers<[1], [0], [0], [1], [0, 0, 1, 1], [], []>} : vector<8x32xf32>, vector<32x128xf32>, vector<8x128xf32> -> vector<8x128xf32>
    %c0_3 = arith.constant 0 : index
    %c0_4 = arith.constant 0 : index
    %3 = vector.load %arg3[%c0_3, %c0_4] : memref<1x128xf32, #tpu.memory_space<vmem>>, vector<1x128xf32>
    %4 = vector.broadcast %3 : vector<1x128xf32> to vector<8x128xf32>
    %5 = arith.addf %2, %4 : vector<8x128xf32>
    %6 = vector.extract_strided_slice %5 {offsets = [0, 0], sizes = [8, 3], strides = [1, 1]} : vector<8x128xf32> to vector<8x3xf32>
    %cst_5 = arith.constant 5.000000e-01 : f32
    %7 = vector.broadcast %cst_5 : f32 to vector<8x3xf32>
    %8 = arith.mulf %6, %7 : vector<8x3xf32>
    %cst_6 = arith.constant 1.41421354 : f32
    %9 = vector.broadcast %cst_6 : f32 to vector<8x3xf32>
    %10 = arith.divf %6, %9 : vector<8x3xf32>
    %11 = math.erf %10 : vector<8x3xf32>
    %cst_7 = arith.constant 1.000000e+00 : f32
    %12 = vector.broadcast %cst_7 : f32 to vector<8x3xf32>
    %13 = arith.addf %12, %11 : vector<8x3xf32>
    %14 = arith.mulf %8, %13 : vector<8x3xf32>
    %c0_8 = arith.constant 0 : index
    %c0_9 = arith.constant 0 : index
    %15 = vector.load %arg4[%c0_8, %c0_9] : memref<8x3xf32, #tpu.memory_space<vmem>>, vector<8x3xf32>
    tpu.vector_store %arg4[%c0_8, %c0_9], %14 {strides = array<i32>} : memref<8x3xf32, #tpu.memory_space<vmem>>, vector<8x3xf32>,
    return
  }
  func.func @transform_0(%arg0: i32) -> (i32, i32) {
    %c0_i32 = arith.constant 0 : i32
    %c0_i32_0 = arith.constant 0 : i32
    return %arg0, %c0_i32 : i32, i32
  }
  func.func @transform_1(%arg0: i32) -> (i32, i32) {
    %c0_i32 = arith.constant 0 : i32
    %c0_i32_0 = arith.constant 0 : i32
    %c0_i32_1 = arith.constant 0 : i32
    return %c0_i32, %c0_i32_0 : i32, i32
  }
  func.func @transform_2(%arg0: i32) -> (i32, i32) {
    %c0_i32 = arith.constant 0 : i32
    %c0_i32_0 = arith.constant 0 : i32
    %c0_i32_1 = arith.constant 0 : i32
    return %c0_i32, %c0_i32_0 : i32, i32
  }
  func.func @transform_3(%arg0: i32) -> (i32, i32) {
    %c0_i32 = arith.constant 0 : i32
    %c0_i32_0 = arith.constant 0 : i32
    return %arg0, %c0_i32 : i32, i32
  }
}

</mosaic_0001>

<llo_original>
// kernel: tpu_custom_call.1
$region0: #{tpu_custom_call.1}
  #allocation0 [shape = 'u32[]', space=smem, size = 0x4, offset = 0x4, fixed_abs, tag = 'smem constant byte address 0x4 - core index']
  #allocation1 [shape = 'u32[144,128]{1,0:T(1,128)}', space=vmem, size = 0x12000, scoped, tag = 'internal scratch']
  %s0 = inlined_call_operand.hbm [shape: f32[8,32], index: 0, kind: input, shape index: {}]
  %s1 = inlined_call_operand.hbm [shape: f32[32,128], index: 1, kind: input, shape index: {}]
  %s2 = inlined_call_operand.vmem [shape: f32[1,128], index: 2, kind: input, shape index: {}]
  %s3 = inlined_call_operand.vmem [shape: f32[8,3], index: 3, kind: output, shape index: {}]
  %s4 = sld [smem:[#allocation0]]
  $region30: #{tpu_custom_call.1} parent=0
    _
  %s6 = ssub.s32 1, %s4
  %s7 = scalar_select 0, %s6, %s4
  $region1: #{tpu_custom_call.1} parent=0
    #allocation2 [shape = 'u8[4096]{0}', space=vmem, size = 0x1000, scoped, tag = 'input window, operand 0, single buffered']
    #allocation3 [shape = 's32[1]{0}', space=sflag, size = 0x4, scoped, tag = 'scoped memory for tpu_custom_call.1']
    #allocation4 [shape = 'u8[16384]{0}', space=vmem, size = 0x4000, scoped, tag = 'input window, operand 1, single buffered']
    #allocation5 [shape = 's32[1]{0}', space=sflag, size = 0x4, scoped, tag = 'scoped memory for tpu_custom_call.1']
    %8 = vsyncpa [#allocation3], 0
    %9 = vsyncpa [#allocation5], 0
    // Predicated region
    $region2: #{tpu_custom_call.1} parent=1 // pred_check
      _
    $region3: #{tpu_custom_call.1} parent=1 // pred_check_branch
      %11 = sbr.rel (0) target = $region5
    $region4: #{tpu_custom_call.1} parent=1 // pred_region
      %s13 = ssub.s32 128, 128
      %14 = vsyncadd [#allocation3], %s13
      %s16 = sshll.u32 [#allocation2], 4
      %s17 = int_to_ptr.vmem [resolvable:$true] %s16
      %19 = dma.hbm_to_vmem [thread:$0]  %s0, 128, %s17, [#allocation3]
    $region5: #{tpu_custom_call.1} parent=1 // pred_fallthru
      _
    // Predicated region
    $region6: #{tpu_custom_call.1} parent=1 // pred_check
      _
    $region7: #{tpu_custom_call.1} parent=1 // pred_check_branch
      %21 = sbr.rel (0) target = $region9
    $region8: #{tpu_custom_call.1} parent=1 // pred_region
      %s23 = ssub.s32 512, 512
      %24 = vsyncadd [#allocation5], %s23
      %s25 = sshll.u32 [#allocation4], 4
      %s26 = int_to_ptr.vmem [resolvable:$true] %s25
      %31 = dma.hbm_to_vmem [thread:$0]  %s1, 512, %s26, [#allocation5], 128, 128, 8
    $region9: #{tpu_custom_call.1} parent=1 // pred_fallthru
      _
    // Predicated region
    $region10: #{tpu_custom_call.1} parent=1 // pred_check
      _
    $region11: #{tpu_custom_call.1} parent=1 // pred_check_branch
      %33 = sbr.rel (0) target = $region13
    $region12: #{tpu_custom_call.1} parent=1 // pred_region
      _
    $region13: #{tpu_custom_call.1} parent=1 // pred_fallthru
      _
    // Predicated region
    $region14: #{tpu_custom_call.1} parent=1 // pred_check
      _
    $region15: #{tpu_custom_call.1} parent=1 // pred_check_branch
      %35 = sbr.rel (0) target = $region17
    $region16: #{tpu_custom_call.1} parent=1 // pred_region
      %36 = dma.done [#allocation3], 128
    $region17: #{tpu_custom_call.1} parent=1 // pred_fallthru
      _
    // Predicated region
    $region18: #{tpu_custom_call.1} parent=1 // pred_check
      _
    $region19: #{tpu_custom_call.1} parent=1 // pred_check_branch
      %38 = sbr.rel (0) target = $region21
    $region20: #{tpu_custom_call.1} parent=1 // pred_region
      %39 = dma.done [#allocation5], 512
    $region21: #{tpu_custom_call.1} parent=1 // pred_fallthru
      _
    %v40 = vld [vmem:[#allocation2] sm:$0xff]
    %v41 = vld [vmem:[#allocation4] sm:$0xff]
    %v42 = vld [vmem:[#allocation4 + $0x8] sm:$0xff]
    %v43 = vld [vmem:[#allocation4 + $0x10] sm:$0xff]
    %v44 = vld [vmem:[#allocation4 + $0x18] sm:$0xff]
    %v45 = vld [vmem:[%s2] sm:$0x1]
    %v47 = vlaneseq
    %v48 = vshrl.u32 %v47, 7
    %v49 = vsub.s32 0, %v48
    %v50 = vrot.slane %v45, %v49
    %vm52 = vcmask 261120
    %v54 = vsel %vm52, %v40, 0
    %56 = vmatprep.subr.mxu0 0.0
    %57 = vmatpush1.msra.mxu0 0.0
    %58 = vmatprep.subr.mxu0 0.0
    %59 = vmatpush1.msra.mxu0 0.0
    %60 = vmatprep.subr.mxu0 0.0
    %61 = vmatpush1.msra.mxu0 0.0
    %62 = vmatprep.subr.mxu0 0.0
    %63 = vmatpush1.msra.mxu0 0.0
    %64 = vmatprep.subr.mxu0 0.0
    %65 = vmatpush1.msra.mxu0 0.0
    %66 = vmatprep.subr.mxu0 0.0
    %67 = vmatpush1.msra.mxu0 0.0
    %68 = vmatprep.subr.mxu0 0.0
    %69 = vmatpush1.msra.mxu0 0.0
    %70 = vmatprep.subr.mxu0 0.0
    %71 = vmatpush1.msra.mxu0 0.0
    %72 = vmatprep.subr.mxu0 0.0
    %73 = vmatpush1.msra.mxu0 0.0
    %74 = vmatprep.subr.mxu0 0.0
    %75 = vmatpush1.msra.mxu0 0.0
    %76 = vmatprep.subr.mxu0 0.0
    %77 = vmatpush1.msra.mxu0 0.0
    %78 = vmatprep.subr.mxu0 0.0
    %79 = vmatpush1.msra.mxu0 0.0
    %80 = vmatprep.subr.mxu0 0.0
    %81 = vmatpush1.msra.mxu0 %v44
    %82 = vmatprep.subr.mxu0 0.0
    %83 = vmatpush1.msra.mxu0 %v43
    %84 = vmatprep.subr.mxu0 0.0
    %85 = vmatpush1.msra.mxu0 %v42
    %86 = vmatprep.subr.mxu0 0.0
    %87 = vmatpush1.msra.mxu0 %v41
    %88 = vmatprep.subr.mxu0 0.0
    %89 = vmatpush2.msra.mxu0 0.0
    %90 = vmatprep.subr.mxu0 0.0
    %91 = vmatpush2.msra.mxu0 0.0
    %92 = vmatprep.subr.mxu0 0.0
    %93 = vmatpush2.msra.mxu0 0.0
    %94 = vmatprep.subr.mxu0 0.0
    %95 = vmatpush2.msra.mxu0 0.0
    %96 = vmatprep.subr.mxu0 0.0
    %97 = vmatpush2.msra.mxu0 0.0
    %98 = vmatprep.subr.mxu0 0.0
    %99 = vmatpush2.msra.mxu0 0.0
    %100 = vmatprep.subr.mxu0 0.0
    %101 = vmatpush2.msra.mxu0 0.0
    %102 = vmatprep.subr.mxu0 0.0
    %103 = vmatpush2.msra.mxu0 0.0
    %104 = vmatprep.subr.mxu0 0.0
    %105 = vmatpush2.msra.mxu0 0.0
    %106 = vmatprep.subr.mxu0 0.0
    %107 = vmatpush2.msra.mxu0 0.0
    %108 = vmatprep.subr.mxu0 0.0
    %109 = vmatpush2.msra.mxu0 0.0
    %110 = vmatprep.subr.mxu0 0.0
    %111 = vmatpush2.msra.mxu0 0.0
    %112 = vmatprep.subr.mxu0 0.0
    %113 = vmatpush2.msra.mxu0 0.0
    %114 = vmatprep.subr.mxu0 0.0
    %115 = vmatpush2.msra.mxu0 0.0
    %116 = vmatprep.subr.mxu0 0.0
    %117 = vmatpush2.msra.mxu0 0.0
    %118 = vmatprep.subr.mxu0 0.0
    %119 = vmatpush2.msra.mxu0 0.0
    %120 = vmatprep.mubr.f32.mxu0 0.0
    %121 = vmatmul.mubr.f32.gmra.mxu0 %v54
    %v122 = vpop.f32.mrf.mxu0
    %v123 = vadd.f32 %v50, %v122
    %v124 = vpop.f32.mrf.mxu0
    %125 = vdwg.mxu0
    %v126 = vmul.f32 %v123, 0.5
    %v127 = vrcp.pop 1.4142135
    %v128 = vmul.f32 %v123, %v127
    %v129 = verf.f32.pop %v128
    %v130 = vadd.f32 %v129, 1.0
    %v131 = vmul.f32 %v126, %v130
    %vm132 = vcmask 23552
    %133 = vst.msk [vmem:[%s3] sm:$0xff] %vm132, %v131
    // Predicated region
    $region22: #{tpu_custom_call.1} parent=1 // pred_check
      _
    $region23: #{tpu_custom_call.1} parent=1 // pred_check_branch
      %135 = sbr.rel (0) target = $region25
    $region24: #{tpu_custom_call.1} parent=1 // pred_region
      _
    $region25: #{tpu_custom_call.1} parent=1 // pred_fallthru
      _
    // Predicated region
    $region26: #{tpu_custom_call.1} parent=1 // pred_check
      _
    $region27: #{tpu_custom_call.1} parent=1 // pred_check_branch
      %137 = sbr.rel (0) target = $region29
    $region28: #{tpu_custom_call.1} parent=1 // pred_region
      _
    $region29: #{tpu_custom_call.1} parent=1 // pred_fallthru
      _
    %138 = vsyncpa [#allocation3], 1
    %139 = vsyncpa [#allocation5], 1

// kernel: tpu_custom_call.1
$region0: #{tpu_custom_call.1}
  #allocation0 [shape = 'u32[]', space=smem, size = 0x4, offset = 0x4, fixed_abs, tag = 'smem constant byte address 0x4 - core index']
  #allocation1 [shape = 'u32[144,128]{1,0:T(1,128)}', space=vmem, size = 0x12000, scoped, tag = 'internal scratch']
  %s0 = inlined_call_operand.hbm [shape: f32[8,32], index: 0, kind: input, shape index: {}]
  %s1 = inlined_call_operand.hbm [shape: f32[32,128], index: 1, kind: input, shape index: {}]
  %s2 = inlined_call_operand.vmem [shape: f32[1,128], index: 2, kind: input, shape index: {}]
  %s3 = inlined_call_operand.vmem [shape: f32[8,3], index: 3, kind: output, shape index: {}]
  %s4 = sld [smem:[#allocation0]]
  $region30: #{tpu_custom_call.1} parent=0
    _
  %s6 = ssub.s32 1, %s4
  %s7 = scalar_select 0, %s6, %s4
  $region1: #{tpu_custom_call.1} parent=0
    #allocation2 [shape = 'u8[4096]{0}', space=vmem, size = 0x1000, scoped, tag = 'input window, operand 0, single buffered']
    #allocation3 [shape = 's32[1]{0}', space=sflag, size = 0x4, scoped, tag = 'scoped memory for tpu_custom_call.1']
    #allocation4 [shape = 'u8[16384]{0}', space=vmem, size = 0x4000, scoped, tag = 'input window, operand 1, single buffered']
    #allocation5 [shape = 's32[1]{0}', space=sflag, size = 0x4, scoped, tag = 'scoped memory for tpu_custom_call.1']
    %8 = vsyncpa [#allocation3], 0
    %9 = vsyncpa [#allocation5], 0
    // Predicated region
    $region2: #{tpu_custom_call.1} parent=1 // pred_check
      _
    $region3: #{tpu_custom_call.1} parent=1 // pred_check_branch
      %11 = sbr.rel (0) target = $region5
    $region4: #{tpu_custom_call.1} parent=1 // pred_region
      %s13 = ssub.s32 128, 128
      %14 = vsyncadd [#allocation3], %s13
      %s16 = sshll.u32 [#allocation2], 4
      %s17 = int_to_ptr.vmem [resolvable:$true] %s16
      %19 = dma.hbm_to_vmem [thread:$0]  %s0, 128, %s17, [#allocation3]
    $region5: #{tpu_custom_call.1} parent=1 // pred_fallthru
      _
    // Predicated region
    $region6: #{tpu_custom_call.1} parent=1 // pred_check
      _
    $region7: #{tpu_custom_call.1} parent=1 // pred_check_branch
      %21 = sbr.rel (0) target = $region9
    $region8: #{tpu_custom_call.1} parent=1 // pred_region
      %s23 = ssub.s32 512, 512
      %24 = vsyncadd [#allocation5], %s23
      %s25 = sshll.u32 [#allocation4], 4
      %s26 = int_to_ptr.vmem [resolvable:$true] %s25
      %31 = dma.hbm_to_vmem [thread:$0]  %s1, 512, %s26, [#allocation5], 128, 128, 8
    $region9: #{tpu_custom_call.1} parent=1 // pred_fallthru
      _
    // Predicated region
    $region10: #{tpu_custom_call.1} parent=1 // pred_check
      _
    $region11: #{tpu_custom_call.1} parent=1 // pred_check_branch
      %33 = sbr.rel (0) target = $region13
    $region12: #{tpu_custom_call.1} parent=1 // pred_region
      _
    $region13: #{tpu_custom_call.1} parent=1 // pred_fallthru
      _
    // Predicated region
    $region14: #{tpu_custom_call.1} parent=1 // pred_check
      _
    $region15: #{tpu_custom_call.1} parent=1 // pred_check_branch
      %35 = sbr.rel (0) target = $region17
    $region16: #{tpu_custom_call.1} parent=1 // pred_region
      %36 = dma.done [#allocation3], 128
    $region17: #{tpu_custom_call.1} parent=1 // pred_fallthru
      _
    // Predicated region
    $region18: #{tpu_custom_call.1} parent=1 // pred_check
      _
    $region19: #{tpu_custom_call.1} parent=1 // pred_check_branch
      %38 = sbr.rel (0) target = $region21
    $region20: #{tpu_custom_call.1} parent=1 // pred_region
      %39 = dma.done [#allocation5], 512
    $region21: #{tpu_custom_call.1} parent=1 // pred_fallthru
      _
    %v40 = vld [vmem:[#allocation2] sm:$0xff]
    %v41 = vld [vmem:[#allocation4] sm:$0xff]
    %v42 = vld [vmem:[#allocation4 + $0x8] sm:$0xff]
    %v43 = vld [vmem:[#allocation4 + $0x10] sm:$0xff]
    %v44 = vld [vmem:[#allocation4 + $0x18] sm:$0xff]
    %v45 = vld [vmem:[%s2] sm:$0x1]
    %v47 = vlaneseq
    %v48 = vshrl.u32 %v47, 7
    %v49 = vsub.s32 0, %v48
    %v50 = vrot.slane %v45, %v49
    %vm52 = vcmask 261120
    %v54 = vsel %vm52, %v40, 0
    %56 = vmatprep.subr.mxu0 0.0
    %57 = vmatpush1.msra.mxu0 0.0
    %58 = vmatprep.subr.mxu0 0.0
    %59 = vmatpush1.msra.mxu0 0.0
    %60 = vmatprep.subr.mxu0 0.0
    %61 = vmatpush1.msra.mxu0 0.0
    %62 = vmatprep.subr.mxu0 0.0
    %63 = vmatpush1.msra.mxu0 0.0
    %64 = vmatprep.subr.mxu0 0.0
    %65 = vmatpush1.msra.mxu0 0.0
    %66 = vmatprep.subr.mxu0 0.0
    %67 = vmatpush1.msra.mxu0 0.0
    %68 = vmatprep.subr.mxu0 0.0
    %69 = vmatpush1.msra.mxu0 0.0
    %70 = vmatprep.subr.mxu0 0.0
    %71 = vmatpush1.msra.mxu0 0.0
    %72 = vmatprep.subr.mxu0 0.0
    %73 = vmatpush1.msra.mxu0 0.0
    %74 = vmatprep.subr.mxu0 0.0
    %75 = vmatpush1.msra.mxu0 0.0
    %76 = vmatprep.subr.mxu0 0.0
    %77 = vmatpush1.msra.mxu0 0.0
    %78 = vmatprep.subr.mxu0 0.0
    %79 = vmatpush1.msra.mxu0 0.0
    %80 = vmatprep.subr.mxu0 0.0
    %81 = vmatpush1.msra.mxu0 %v44
    %82 = vmatprep.subr.mxu0 0.0
    %83 = vmatpush1.msra.mxu0 %v43
    %84 = vmatprep.subr.mxu0 0.0
    %85 = vmatpush1.msra.mxu0 %v42
    %86 = vmatprep.subr.mxu0 0.0
    %87 = vmatpush1.msra.mxu0 %v41
    %88 = vmatprep.subr.mxu0 0.0
    %89 = vmatpush2.msra.mxu0 0.0
    %90 = vmatprep.subr.mxu0 0.0
    %91 = vmatpush2.msra.mxu0 0.0
    %92 = vmatprep.subr.mxu0 0.0
    %93 = vmatpush2.msra.mxu0 0.0
    %94 = vmatprep.subr.mxu0 0.0
    %95 = vmatpush2.msra.mxu0 0.0
    %96 = vmatprep.subr.mxu0 0.0
    %97 = vmatpush2.msra.mxu0 0.0
    %98 = vmatprep.subr.mxu0 0.0
    %99 = vmatpush2.msra.mxu0 0.0
    %100 = vmatprep.subr.mxu0 0.0
    %101 = vmatpush2.msra.mxu0 0.0
    %102 = vmatprep.subr.mxu0 0.0
    %103 = vmatpush2.msra.mxu0 0.0
    %104 = vmatprep.subr.mxu0 0.0
    %105 = vmatpush2.msra.mxu0 0.0
    %106 = vmatprep.subr.mxu0 0.0
    %107 = vmatpush2.msra.mxu0 0.0
    %108 = vmatprep.subr.mxu0 0.0
    %109 = vmatpush2.msra.mxu0 0.0
    %110 = vmatprep.subr.mxu0 0.0
    %111 = vmatpush2.msra.mxu0 0.0
    %112 = vmatprep.subr.mxu0 0.0
    %113 = vmatpush2.msra.mxu0 0.0
    %114 = vmatprep.subr.mxu0 0.0
    %115 = vmatpush2.msra.mxu0 0.0
    %116 = vmatprep.subr.mxu0 0.0
    %117 = vmatpush2.msra.mxu0 0.0
    %118 = vmatprep.subr.mxu0 0.0
    %119 = vmatpush2.msra.mxu0 0.0
    %120 = vmatprep.mubr.f32.mxu0 0.0
    %121 = vmatmul.mubr.f32.gmra.mxu0 %v54
    %v122 = vpop.f32.mrf.mxu0
    %v123 = vadd.f32 %v50, %v122
    %v124 = vpop.f32.mrf.mxu0
    %125 = vdwg.mxu0
    %v126 = vmul.f32 %v123, 0.5
    %v127 = vrcp.pop 1.4142135
    %v128 = vmul.f32 %v123, %v127
    %v129 = verf.f32.pop %v128
    %v130 = vadd.f32 %v129, 1.0
    %v131 = vmul.f32 %v126, %v130
    %vm132 = vcmask 23552
    %133 = vst.msk [vmem:[%s3] sm:$0xff] %vm132, %v131
    // Predicated region
    $region22: #{tpu_custom_call.1} parent=1 // pred_check
      _
    $region23: #{tpu_custom_call.1} parent=1 // pred_check_branch
      %135 = sbr.rel (0) target = $region25
    $region24: #{tpu_custom_call.1} parent=1 // pred_region
      _
    $region25: #{tpu_custom_call.1} parent=1 // pred_fallthru
      _
    // Predicated region
    $region26: #{tpu_custom_call.1} parent=1 // pred_check
      _
    $region27: #{tpu_custom_call.1} parent=1 // pred_check_branch
      %137 = sbr.rel (0) target = $region29
    $region28: #{tpu_custom_call.1} parent=1 // pred_region
      _
    $region29: #{tpu_custom_call.1} parent=1 // pred_fallthru
      _
    %138 = vsyncpa [#allocation3], 1
    %139 = vsyncpa [#allocation5], 1

</llo_original>
